<compile_context>
chip_gen: v7x
topology: tpu7x:2x2x1
jax: 0.10.0
libtpu: 0.0.40
codegen_flags: <defaults>
</compile_context>

<pallas_src>
import math
from typing import NamedTuple

import jax
import jax.numpy as jnp
from jax.experimental import pallas as pl
from jax.experimental.pallas import tpu as pltpu


def _round_up(x, m):
    return (x + m - 1) // m * m


def _largest_aligned_divisor(n, cap, align=128):
    """Largest multiple of `align` that divides n and is <= cap (None if none)."""
    best = None
    k = align
    lim = min(cap, n)
    while k <= lim:
        if n % k == 0:
            best = k
        k += align
    return best


class EmbeddingsParams(NamedTuple):
    wt: jax.Array      # (Kp, Np) scaled, transposed, padded, compute-dtype weight
    bias: jax.Array    # (1, Np)  scaled f32 bias (zero-padded)
    vocab: int
    d_model: int
    tk: int            # K tile chosen at init (divides Kp)


# ---------------------------------------------------------------------------
# kernels
# ---------------------------------------------------------------------------
def _embeddings_kernel(x_ref, wt_ref, b_ref, o_ref, acc_ref):
    """3-D grid (M tiles, N tiles, K tiles); K is the reduction axis (last, 'arbitrary')."""
    k = pl.program_id(2)

    @pl.when(k == 0)
    def _init():
        # Fold the (already-scaled) bias into the accumulator init: the epilogue
        # becomes a bare cast (no extra VPU add / vreg copy per output tile).
        acc_ref[...] = jnp.broadcast_to(b_ref[...], acc_ref.shape)

    x = x_ref[...]
    if x_ref.dtype != wt_ref.dtype:
        # Cheap in-kernel cast (hidden under the MXU); avoids an HBM pass over x.
        x = x.astype(wt_ref.dtype)
    acc_ref[...] += jnp.dot(x, wt_ref[...], preferred_element_type=jnp.float32)

    @pl.when(k == pl.num_programs(2) - 1)
    def _epilogue():
        o_ref[...] = acc_ref[...].astype(o_ref.dtype)


def _embeddings_kernel_nk1(x_ref, wt_ref, b_ref, o_ref):
    """Single-K-tile variant: no f32 scratch; write the output tile directly."""
    x = x_ref[...]
    if x_ref.dtype != wt_ref.dtype:
        x = x.astype(wt_ref.dtype)
    acc = jnp.dot(x, wt_ref[...], preferred_element_type=jnp.float32)
    o_ref[...] = (acc + b_ref[...]).astype(o_ref.dtype)


# ---------------------------------------------------------------------------
# one-time parameter preparation (NOT per forward call)
# ---------------------------------------------------------------------------
def prepare_embeddings_params(weight, bias, *, compute_dtype=jnp.bfloat16,
                              tk_max=1024):
    """Fold sqrt(d_model) into W and b, transpose W to (vocab, d_model), zero-pad to
    the tiled layout (lane-dense d_model >= 128; K an exact tile multiple when
    possible) and cast the weight stream to compute_dtype (bf16 halves HBM bytes;
    f32 accumulation is kept in the kernel).  compute_dtype=None -> exact f32.

    weight: (d_model, vocab), bias: (d_model,)   (nn.Linear(vocab, d_model) layout)."""
    d_model, vocab = weight.shape
    scale = math.sqrt(d_model)
    wt = (jnp.asarray(weight, jnp.float32) * scale).T          # (vocab, d_model)
    b = jnp.asarray(bias, jnp.float32) * scale

    # --- K (vocab) tiling fixed once here so the forward path never re-pads W. ---
    if vocab <= tk_max:
        tk, Kp = vocab, vocab                                  # single K tile, no pad
    else:
        tk = _largest_aligned_divisor(vocab, tk_max)
        if tk is not None:
            Kp = vocab                                         # exact tiling, no pad
        else:
            tk = tk_max                                        # rare: pad K once here
            Kp = _round_up(vocab, tk)

    # --- Lane-dense output: d_model padded up to a multiple of 128 (>= 128). ---
    Np = max(_round_up(d_model, 128), 128)

    if (Kp, Np) != (vocab, d_model):
        wt = jnp.pad(wt, ((0, Kp - vocab), (0, Np - d_model)))
    b2 = b.reshape(1, d_model)
    if Np != d_model:
        b2 = jnp.pad(b2, ((0, 0), (0, Np - d_model)))

    if compute_dtype is not None:
        wt = wt.astype(compute_dtype)

    return EmbeddingsParams(wt=wt, bias=b2, vocab=vocab, d_model=d_model, tk=tk)


# ---------------------------------------------------------------------------
# forward
# ---------------------------------------------------------------------------
def embeddings_forward(x, params, *, tm_max=256, tn_max=1024):
    """x: (..., vocab) -> (..., d_model) in x.dtype.  Computes (x @ W.T + b) * sqrt(d_model)
    with W/b pre-folded/pre-laid-out by prepare_embeddings_params."""
    wt, b2 = params.wt, params.bias
    vocab, d_model, tk = params.vocab, params.d_model, params.tk
    Kp, Np = wt.shape
    nk = Kp // tk

    lead = x.shape[:-1]
    M = math.prod(lead) if lead else 1
    out_dtype = x.dtype
    x2 = x.reshape(M, vocab)

    # M tile (16-row aligned so packed bf16 vregs stay full). Only M (cheap) and —
    # in the rare non-128-multiple-vocab case — K are padded per call.
    tm = min(tm_max, _round_up(M, 16))
    Mp = _round_up(M, tm)
    if (Mp, Kp) != (M, vocab):
        x2 = jnp.pad(x2, ((0, Mp - M), (0, Kp - vocab)))

    tn = _largest_aligned_divisor(Np, tn_max)      # Np is a 128-multiple -> always found
    gm, gn = Mp // tm, Np // tn
    # Keep the parallel grid non-degenerate so both v7x TensorCores get work.
    if gm == 1 and gn == 1 and tn % 256 == 0:
        tn //= 2
        gn = 2

    # Explicit VMEM budget (double-buffered x/W/out tiles + f32 accumulator + bias),
    # clamped under v7x's 64 MiB physical VMEM; raises v5e's 16 MiB scoped default.
    xb = x2.dtype.itemsize
    wb = wt.dtype.itemsize
    ob = jnp.dtype(out_dtype).itemsize
    working = (2 * tm * tk * xb + 2 * tk * tn * wb + 2 * tm * tn * ob
               + (tm * tn * 4 if nk > 1 else 0) + 2 * tn * 4)
    vmem_limit = int(min(max(working + (8 << 20), 32 << 20), 56 << 20))

    if nk == 1:
        grid = (gm, gn)
        kernel = _embeddings_kernel_nk1
        in_specs = [
            pl.BlockSpec((tm, tk), lambda i, j: (i, 0)),     # x tile
            pl.BlockSpec((tk, tn), lambda i, j: (0, j)),     # W^T tile
            pl.BlockSpec((1, tn), lambda i, j: (0, j)),      # bias tile
        ]
        out_specs = pl.BlockSpec((tm, tn), lambda i, j: (i, j))
        scratch_shapes = []
        semantics = ("parallel", "parallel")
    else:
        grid = (gm, gn, nk)
        kernel = _embeddings_kernel
        in_specs = [
            pl.BlockSpec((tm, tk), lambda i, j, k: (i, k)),  # x tile
            pl.BlockSpec((tk, tn), lambda i, j, k: (k, j)),  # W^T tile
            pl.BlockSpec((1, tn), lambda i, j, k: (0, j)),   # bias tile
        ]
        out_specs = pl.BlockSpec((tm, tn), lambda i, j, k: (i, j))
        scratch_shapes = [pltpu.VMEM((tm, tn), jnp.float32)]
        semantics = ("parallel", "parallel", "arbitrary")

    out2 = pl.pallas_call(
        kernel,
        out_shape=jax.ShapeDtypeStruct((Mp, Np), out_dtype),
        grid_spec=pltpu.PrefetchScalarGridSpec(
            num_scalar_prefetch=0,
            grid=grid,
            in_specs=in_specs,
            out_specs=out_specs,
            scratch_shapes=scratch_shapes,
        ),
        compiler_params=pltpu.CompilerParams(
            dimension_semantics=semantics,
            vmem_limit_bytes=vmem_limit),
    )(x2, wt, b2)

    out2 = out2[:M, :d_model]
    return out2.reshape(*lead, d_model)


if __name__ == "__main__":
    key = jax.random.PRNGKey(0)
    kx, kw, kb, kx2, kw2, kb2, kx3, kw3, kb3 = jax.random.split(key, 9)
    HI = jax.lax.Precision.HIGHEST

    # --- test 1: small shapes, exact f32 weight path (compute_dtype=None) ----------
    batch, seq, vocab, d_model = 2, 8, 32, 32
    x = jax.random.normal(kx, (batch, seq, vocab), dtype=jnp.float32)
    bound = 1.0 / math.sqrt(vocab)
    weight = jax.random.uniform(kw, (d_model, vocab), jnp.float32, -bound, bound)
    bias = jax.random.uniform(kb, (d_model,), jnp.float32, -bound, bound)

    params = prepare_embeddings_params(weight, bias, compute_dtype=None)
    out = jax.block_until_ready(embeddings_forward(x, params))
    ref = (jnp.einsum('bsv,dv->bsd', x, weight, precision=HI) + bias) * math.sqrt(d_model)
    assert out.shape == (batch, seq, d_model)
    assert jnp.allclose(out, ref, atol=1e-4, rtol=1e-4)

    # --- test 2: K-tiled reduction (vocab=2560 -> tk=640, 4 K steps) with the default
    #     bf16 weight stream; f32 accumulation keeps error in the ~1e-3 relative band.
    b2_, s2_, vocab2, d_model2 = 3, 5, 2560, 256
    x_b = jax.random.normal(kx2, (b2_, s2_, vocab2), dtype=jnp.float32)
    bound2 = 1.0 / math.sqrt(vocab2)
    w_b = jax.random.uniform(kw2, (d_model2, vocab2), jnp.float32, -bound2, bound2)
    bb = jax.random.uniform(kb2, (d_model2,), jnp.float32, -bound2, bound2)

    params_b = prepare_embeddings_params(w_b, bb)            # bf16 weights by default
    out_b = jax.block_until_ready(embeddings_forward(x_b, params_b))
    ref_b = (jnp.einsum('bsv,dv->bsd', x_b, w_b, precision=HI) + bb) * math.sqrt(d_model2)
    assert out_b.shape == (b2_, s2_, d_model2)
    assert jnp.allclose(out_b, ref_b, atol=3e-1, rtol=3e-2)   # bf16 weight error band

    # --- test 3: awkward shapes — vocab not a 128 multiple (K padded once at init +
    #     per-call for x, 2 K steps), d_model < 128 (output padded lane-dense), f32.
    b3_, s3_, vocab3, d_model3 = 2, 4, 1100, 96
    x_c = jax.random.normal(kx3, (b3_, s3_, vocab3), dtype=jnp.float32)
    bound3 = 1.0 / math.sqrt(vocab3)
    w_c = jax.random.uniform(kw3, (d_model3, vocab3), jnp.float32, -bound3, bound3)
    bc = jax.random.uniform(kb3, (d_model3,), jnp.float32, -bound3, bound3)

    params_c = prepare_embeddings_params(w_c, bc, compute_dtype=None)
    out_c = jax.block_until_ready(embeddings_forward(x_c, params_c))
    ref_c = (jnp.einsum('bsv,dv->bsd', x_c, w_c, precision=HI) + bc) * math.sqrt(d_model3)
    assert out_c.shape == (b3_, s3_, d_model3)
    assert jnp.allclose(out_c, ref_c, atol=5e-3, rtol=5e-3)

    print("KERNEL_OK")
</pallas_src>

<mosaic_0001>
module attributes {stable_mosaic.version = 11 : i64} {
  func.func @_embeddings_kernel_nk1(%arg0: i32, %arg1: i32, %arg2: memref<16x32xf32, #tpu.memory_space<vmem>>, %arg3: memref<32x128xf32, #tpu.memory_space<vmem>>, %arg4: memref<1x128xf32, #tpu.memory_space<vmem>>, %arg5: memref<16x128xf32, #tpu.memory_space<vmem>>) attributes {dimension_semantics = [#tpu.dimension_semantics<parallel>, #tpu.dimension_semantics<parallel>], iteration_bounds = array<i64: 1, 1>, scalar_prefetch = 0 : i64, scratch_operands = 0 : i64, tpu.core_type = #tpu.core_type<tc>, window_params = [{transform_indices = @transform_0, window_bounds = array<i64: 16, 32>}, {transform_indices = @transform_1, window_bounds = array<i64: 32, 128>}, {transform_indices = @transform_2, window_bounds = array<i64: 1, 128>}, {transform_indices = @transform_3, window_bounds = array<i64: 16, 128>}]} {
    %c0 = arith.constant 0 : index
    %c0_0 = arith.constant 0 : index
    %0 = vector.load %arg2[%c0, %c0_0] : memref<16x32xf32, #tpu.memory_space<vmem>>, vector<16x32xf32>
    %c0_1 = arith.constant 0 : index
    %c0_2 = arith.constant 0 : index
    %1 = vector.load %arg3[%c0_1, %c0_2] : memref<32x128xf32, #tpu.memory_space<vmem>>, vector<32x128xf32>
    %cst = arith.constant dense<0.000000e+00> : vector<16x128xf32>
    %2 = tpu.matmul %0, %1, %cst {dimension_numbers = #tpu.dot_dimension_numbers<[1], [0], [0], [1], [0, 0, 1, 1], [], []>} : vector<16x32xf32>, vector<32x128xf32>, vector<16x128xf32> -> vector<16x128xf32>
    %c0_3 = arith.constant 0 : index
    %c0_4 = arith.constant 0 : index
    %3 = vector.load %arg4[%c0_3, %c0_4] : memref<1x128xf32, #tpu.memory_space<vmem>>, vector<1x128xf32>
    %4 = vector.broadcast %3 : vector<1x128xf32> to vector<16x128xf32>
    %5 = arith.addf %2, %4 : vector<16x128xf32>
    %c0_5 = arith.constant 0 : index
    %c0_6 = arith.constant 0 : index
    %6 = vector.load %arg5[%c0_5, %c0_6] : memref<16x128xf32, #tpu.memory_space<vmem>>, vector<16x128xf32>
    tpu.vector_store %arg5[%c0_5, %c0_6], %5 {strides = array<i32>} : memref<16x128xf32, #tpu.memory_space<vmem>>, vector<16x128xf32>,
    return
  }
  func.func @transform_0(%arg0: i32, %arg1: i32) -> (i32, i32) {
    %c0_i32 = arith.constant 0 : i32
    %c0_i32_0 = arith.constant 0 : i32
    return %arg0, %c0_i32 : i32, i32
  }
  func.func @transform_1(%arg0: i32, %arg1: i32) -> (i32, i32) {
    %c0_i32 = arith.constant 0 : i32
    %c0_i32_0 = arith.constant 0 : i32
    return %c0_i32, %arg1 : i32, i32
  }
  func.func @transform_2(%arg0: i32, %arg1: i32) -> (i32, i32) {
    %c0_i32 = arith.constant 0 : i32
    %c0_i32_0 = arith.constant 0 : i32
    return %c0_i32, %arg1 : i32, i32
  }
  func.func @transform_3(%arg0: i32, %arg1: i32) -> (i32, i32) {
    %c0_i32 = arith.constant 0 : i32
    return %arg0, %arg1 : i32, i32
  }
}

</mosaic_0001>

<llo_original>
// kernel: tpu_custom_call.1
$region0: #{tpu_custom_call.1}
  #allocation0 [shape = 'u32[]', space=smem, size = 0x4, offset = 0x4, fixed_abs, tag = 'smem constant byte address 0x4 - core index']
  #allocation1 [shape = 'u32[144,128]{1,0:T(1,128)}', space=vmem, size = 0x12000, scoped, tag = 'internal scratch']
  %s0 = inlined_call_operand.hbm [shape: f32[16,32], index: 0, kind: input, shape index: {}]
  %s1 = inlined_call_operand.hbm [shape: f32[32,128], index: 1, kind: input, shape index: {}]
  %s2 = inlined_call_operand.vmem [shape: f32[1,128], index: 2, kind: input, shape index: {}]
  %s3 = inlined_call_operand.hbm [shape: f32[16,128], index: 3, kind: output, shape index: {}]
  %s4 = sld [smem:[#allocation0]]
  $region30: #{tpu_custom_call.1} parent=0
    _
  %s6 = ssub.s32 1, %s4
  %s7 = scalar_select 0, %s6, %s4
  $region1: #{tpu_custom_call.1} parent=0
    #allocation2 [shape = 'u8[8192]{0}', space=vmem, size = 0x2000, scoped, tag = 'input window, operand 0, single buffered']
    #allocation3 [shape = 's32[1]{0}', space=sflag, size = 0x4, scoped, tag = 'scoped memory for tpu_custom_call.1']
    #allocation4 [shape = 's32[1]{0}', space=sflag, size = 0x4, scoped, tag = 'scoped memory for tpu_custom_call.1']
    #allocation5 [shape = 'u8[16384]{0}', space=vmem, size = 0x4000, scoped, tag = 'input window, operand 1, single buffered']
    #allocation6 [shape = 's32[1]{0}', space=sflag, size = 0x4, scoped, tag = 'scoped memory for tpu_custom_call.1']
    #allocation7 [shape = 'u8[8192]{0}', space=vmem, size = 0x2000, scoped, tag = 'output window, operand 0, single buffered']
    %8 = vsyncpa [#allocation3], 0
    %9 = vsyncpa [#allocation6], 0
    %10 = vsyncpa [#allocation4], 0
    // Predicated region
    $region2: #{tpu_custom_call.1} parent=1 // pred_check
      _
    $region3: #{tpu_custom_call.1} parent=1 // pred_check_branch
      %12 = sbr.rel (0) target = $region5
    $region4: #{tpu_custom_call.1} parent=1 // pred_region
      %s14 = ssub.s32 256, 256
      %15 = vsyncadd [#allocation3], %s14
      %s16 = sshll.u32 [#allocation2], 4
      %s17 = int_to_ptr.vmem [resolvable:$true] %s16
      %22 = dma.hbm_to_vmem [thread:$0]  %s0, 256, %s17, [#allocation3], 128, 128, 8
    $region5: #{tpu_custom_call.1} parent=1 // pred_fallthru
      _
    // Predicated region
    $region6: #{tpu_custom_call.1} parent=1 // pred_check
      _
    $region7: #{tpu_custom_call.1} parent=1 // pred_check_branch
      %24 = sbr.rel (0) target = $region9
    $region8: #{tpu_custom_call.1} parent=1 // pred_region
      %s26 = ssub.s32 512, 512
      %27 = vsyncadd [#allocation6], %s26
      %s28 = sshll.u32 [#allocation5], 4
      %s29 = int_to_ptr.vmem [resolvable:$true] %s28
      %34 = dma.hbm_to_vmem [thread:$0]  %s1, 512, %s29, [#allocation6], 128, 128, 8
    $region9: #{tpu_custom_call.1} parent=1 // pred_fallthru
      _
    // Predicated region
    $region10: #{tpu_custom_call.1} parent=1 // pred_check
      _
    $region11: #{tpu_custom_call.1} parent=1 // pred_check_branch
      %36 = sbr.rel (0) target = $region13
    $region12: #{tpu_custom_call.1} parent=1 // pred_region
      _
    $region13: #{tpu_custom_call.1} parent=1 // pred_fallthru
      _
    // Predicated region
    $region14: #{tpu_custom_call.1} parent=1 // pred_check
      _
    $region15: #{tpu_custom_call.1} parent=1 // pred_check_branch
      %38 = sbr.rel (0) target = $region17
    $region16: #{tpu_custom_call.1} parent=1 // pred_region
      %39 = dma.done [#allocation3], 256
    $region17: #{tpu_custom_call.1} parent=1 // pred_fallthru
      _
    // Predicated region
    $region18: #{tpu_custom_call.1} parent=1 // pred_check
      _
    $region19: #{tpu_custom_call.1} parent=1 // pred_check_branch
      %41 = sbr.rel (0) target = $region21
    $region20: #{tpu_custom_call.1} parent=1 // pred_region
      %42 = dma.done [#allocation6], 512
    $region21: #{tpu_custom_call.1} parent=1 // pred_fallthru
      _
    %v43 = vld [vmem:[#allocation2] sm:$0xff]
    %v44 = vld [vmem:[#allocation2 + $0x8] sm:$0xff]
    %v45 = vld [vmem:[#allocation5] sm:$0xff]
    %v46 = vld [vmem:[#allocation5 + $0x8] sm:$0xff]
    %v47 = vld [vmem:[#allocation5 + $0x10] sm:$0xff]
    %v48 = vld [vmem:[#allocation5 + $0x18] sm:$0xff]
    %v49 = vld [vmem:[%s2] sm:$0x1]
    %v51 = vlaneseq
    %v52 = vshrl.u32 %v51, 7
    %v53 = vsub.s32 0, %v52
    %v54 = vrot.slane %v49, %v53
    %vm56 = vcmask 261120
    %v58 = vsel %vm56, %v43, 0
    %v61 = vsel %vm56, %v44, 0
    %63 = vmatprep.subr.mxu0 0.0
    %64 = vmatpush1.msra.mxu0 %v45
    %65 = vmatprep.subr.mxu0 0.0
    %66 = vmatpush1.msra.mxu0 %v46
    %67 = vmatprep.subr.mxu0 0.0
    %68 = vmatpush1.msra.mxu0 %v47
    %69 = vmatprep.subr.mxu0 0.0
    %70 = vmatpush1.msra.mxu0 %v48
    %71 = vmatprep.subr.mxu0 0.0
    %72 = vmatpush1.msra.mxu0 0.0
    %73 = vmatprep.subr.mxu0 0.0
    %74 = vmatpush1.msra.mxu0 0.0
    %75 = vmatprep.subr.mxu0 0.0
    %76 = vmatpush1.msra.mxu0 0.0
    %77 = vmatprep.subr.mxu0 0.0
    %78 = vmatpush1.msra.mxu0 0.0
    %79 = vmatprep.subr.mxu0 0.0
    %80 = vmatpush1.msra.mxu0 0.0
    %81 = vmatprep.subr.mxu0 0.0
    %82 = vmatpush1.msra.mxu0 0.0
    %83 = vmatprep.subr.mxu0 0.0
    %84 = vmatpush1.msra.mxu0 0.0
    %85 = vmatprep.subr.mxu0 0.0
    %86 = vmatpush1.msra.mxu0 0.0
    %87 = vmatprep.subr.mxu0 0.0
    %88 = vmatpush1.msra.mxu0 0.0
    %89 = vmatprep.subr.mxu0 0.0
    %90 = vmatpush1.msra.mxu0 0.0
    %91 = vmatprep.subr.mxu0 0.0
    %92 = vmatpush1.msra.mxu0 0.0
    %93 = vmatprep.subr.mxu0 0.0
    %94 = vmatpush1.msra.mxu0 0.0
    %95 = vmatprep.subr.mxu0 0.0
    %96 = vmatpush1.msra.mxu0 0.0
    %97 = vmatprep.subr.mxu0 0.0
    %98 = vmatpush1.msra.mxu0 0.0
    %99 = vmatprep.subr.mxu0 0.0
    %100 = vmatpush1.msra.mxu0 0.0
    %101 = vmatprep.subr.mxu0 0.0
    %102 = vmatpush1.msra.mxu0 0.0
    %103 = vmatprep.subr.mxu0 0.0
    %104 = vmatpush1.msra.mxu0 0.0
    %105 = vmatprep.subr.mxu0 0.0
    %106 = vmatpush1.msra.mxu0 0.0
    %107 = vmatprep.subr.mxu0 0.0
    %108 = vmatpush1.msra.mxu0 0.0
    %109 = vmatprep.subr.mxu0 0.0
    %110 = vmatpush1.msra.mxu0 0.0
    %111 = vmatprep.subr.mxu0 0.0
    %112 = vmatpush1.msra.mxu0 0.0
    %113 = vmatprep.subr.mxu0 0.0
    %114 = vmatpush1.msra.mxu0 0.0
    %115 = vmatprep.subr.mxu0 0.0
    %116 = vmatpush1.msra.mxu0 0.0
    %117 = vmatprep.subr.mxu0 0.0
    %118 = vmatpush1.msra.mxu0 0.0
    %119 = vmatprep.subr.mxu0 0.0
    %120 = vmatpush1.msra.mxu0 0.0
    %121 = vmatprep.subr.mxu0 0.0
    %122 = vmatpush1.msra.mxu0 0.0
    %123 = vmatprep.subr.mxu0 0.0
    %124 = vmatpush1.msra.mxu0 0.0
    %125 = vmatprep.subr.mxu0 0.0
    %126 = vmatpush1.msra.mxu0 0.0
    %127 = vmatprep.mubr.f32.mxu0 0.0
    %128 = vmatmul.mubr.f32.gmra.mrb[0].mxu0 %v58
    %v129 = vpop.f32.mrb[0].mxu0
    %v130 = vadd.f32 %v54, %v129
    %v131 = vpop.f32.mrb[0].mxu0
    %132 = vmatprep.mubr.f32.mxu0 0.0
    %133 = vmatmul.mubr.f32.gmra.mrb[0].mxu0 %v61
    %v134 = vpop.f32.mrb[0].mxu0
    %v135 = vadd.f32 %v54, %v134
    %v136 = vpop.f32.mrb[0].mxu0
    %137 = vdwg.mxu0
    %138 = vst [vmem:[#allocation7] sm:$0xff] %v130
    %139 = vst [vmem:[#allocation7 + $0x8] sm:$0xff] %v135
    // Predicated region
    $region22: #{tpu_custom_call.1} parent=1 // pred_check
      _
    $region23: #{tpu_custom_call.1} parent=1 // pred_check_branch
      %141 = sbr.rel (0) target = $region25
    $region24: #{tpu_custom_call.1} parent=1 // pred_region
      %s143 = ssub.s32 256, 256
      %144 = vsyncadd [#allocation4], %s143
      %s145 = sshll.u32 [#allocation7], 4
      %s146 = int_to_ptr.vmem [resolvable:$true] %s145
      %151 = dma.vmem_to_hbm [thread:$0]  %s146, 256, %s3, [#allocation4], 128, 128, 8
    $region25: #{tpu_custom_call.1} parent=1 // pred_fallthru
      _
    // Predicated region
    $region26: #{tpu_custom_call.1} parent=1 // pred_check
      _
    $region27: #{tpu_custom_call.1} parent=1 // pred_check_branch
      %153 = sbr.rel (0) target = $region29
    $region28: #{tpu_custom_call.1} parent=1 // pred_region
      %154 = dma.done [#allocation4], 256
    $region29: #{tpu_custom_call.1} parent=1 // pred_fallthru
      _
    %155 = vsyncpa [#allocation3], 1
    %156 = vsyncpa [#allocation6], 1
    %157 = vsyncpa [#allocation4], 1

</llo_original>
